<compile_context>
chip_gen: v7x
topology: tpu7x:2x2x1
jax: 0.10.0
libtpu: 0.0.40
codegen_flags: <defaults>
</compile_context>

<pallas_src>
import jax
import jax.numpy as jnp
from jax import lax
from jax.experimental import pallas as pl
from jax.experimental.pallas import tpu as pltpu


def _round_up(x, m):
    return ((x + m - 1) // m) * m


# ----------------------------------------------------------------------------
# Kernels
# ----------------------------------------------------------------------------
def _linear_single_block_kernel(x_ref, w_ref, b_ref, o_ref):
    # x: (M, K), w: (N, K) PyTorch layout, b: (1, N), o: (M, N) f32
    o_ref[...] = (
        lax.dot_general(
            x_ref[...], w_ref[...],
            dimension_numbers=(((1,), (1,)), ((), ())),   # x @ w.T on the MXU
            preferred_element_type=jnp.float32,
        )
        + b_ref[...]
    )


def _linear_tiled_kernel(x_ref, w_ref, b_ref, o_ref):
    # x: (tm, tk), w: (tn, tk), b: (1, tn), o: (tm, tn) f32, resident across K.
    k = pl.program_id(2)
    partial = lax.dot_general(
        x_ref[...], w_ref[...],
        dimension_numbers=(((1,), (1,)), ((), ())),
        preferred_element_type=jnp.float32,
    )

    @pl.when(k == 0)
    def _():
        # Initialise the resident output block with the bias: saves a zero-init
        # and the separate "+ bias" in the epilogue.
        o_ref[...] = partial + b_ref[...]

    @pl.when(k > 0)
    def _():
        o_ref[...] += partial


# ----------------------------------------------------------------------------
# Wrapper
# ----------------------------------------------------------------------------
_FAST_PATH_BYTES = 4 * 1024 * 1024   # whole problem comfortably inside VMEM
_TK_CAP = 2048                       # per-step K extent for the tiled path


def _pick_tk(K):
    """K is the reduction axis: it must be covered exactly (no garbage adds)."""
    if K <= _TK_CAP:
        return K, K                  # single K step, no loop, no padding
    for cand in (2048, 1792, 1536, 1280, 1024, 896, 768, 640, 512, 384, 256, 128):
        if K % cand == 0:
            return cand, K           # exact divisor -> no padding
    # Last resort: pad K with zeros (keeps the reduction exact).
    tk = 512
    return tk, _round_up(K, tk)


def linear_net_forward(x, weight, bias):
    """LinearNet forward: y = flatten(x) @ weight.T + bias.

    x:      (batch, ...) any trailing shape, flattened like torch .view(B, -1)
    weight: (num_classes, input_size)  -- PyTorch nn.Linear layout, untouched
    bias:   (num_classes,)
    """
    batch = x.shape[0]
    x_flat = x.reshape(batch, -1)
    M, K = x_flat.shape
    N, Kw = weight.shape
    assert Kw == K, f"input_size mismatch: weight has {Kw}, flattened x has {K}"
    b2 = bias.reshape(1, N)
    elem = x_flat.dtype.itemsize
    out_dtype = jnp.promote_types(x_flat.dtype, weight.dtype)

    # ---------------- fast path: one block, no grid ----------------
    if (M * K + N * K + N + M * N) * elem <= _FAST_PATH_BYTES:
        out = pl.pallas_call(
            _linear_single_block_kernel,
            out_shape=jax.ShapeDtypeStruct((M, N), jnp.float32),
            cost_estimate=pl.CostEstimate(
                flops=2 * M * N * K,
                transcendentals=0,
                bytes_accessed=(M * K + N * K + N + M * N) * elem,
            ),
        )(x_flat, weight, b2)
        return out.astype(out_dtype)

    # ---------------- tiled path ----------------
    tk, Kp = _pick_tk(K)
    if Kp != K:   # rare: K > 2048 with no 128-multiple divisor
        x_in = jnp.pad(x_flat, ((0, 0), (0, Kp - K)))
        w_in = jnp.pad(weight, ((0, 0), (0, Kp - K)))
    else:
        x_in, w_in = x_flat, weight

    # M: not a reduction axis -> edge blocks are masked on store, never pad x.
    if M <= 8:
        tm = M                                   # full-dim block (allowed)
    elif M <= 1024:
        tm = _round_up(-(-M // 2), 8)            # 2 M-blocks -> both v7x TCs busy
    else:
        tm = 512

    # N: keep the true (small) width instead of padding to 128; large N gets
    # lane-dense 512-wide blocks with masked edge blocks.
    tn = N if N <= 512 else 512

    grid = (pl.cdiv(M, tm), pl.cdiv(N, tn), Kp // tk)

    # Double-buffered input blocks + resident output block, plus headroom.
    need = 2 * (tm * tk + tn * tk + tn) * elem + 2 * tm * tn * 4
    vmem_limit = min(max(need + (16 << 20), 32 << 20), 48 << 20)

    out = pl.pallas_call(
        _linear_tiled_kernel,
        out_shape=jax.ShapeDtypeStruct((M, N), jnp.float32),
        grid=grid,
        in_specs=[
            pl.BlockSpec((tm, tk), lambda i, j, k: (i, k)),   # activations
            pl.BlockSpec((tn, tk), lambda i, j, k: (j, k)),   # weight (no transpose);
                                                              # resident when N/K grids == 1
            pl.BlockSpec((1, tn), lambda i, j, k: (0, j)),    # bias
        ],
        out_specs=pl.BlockSpec((tm, tn), lambda i, j, k: (i, j)),
        compiler_params=pltpu.CompilerParams(
            dimension_semantics=("parallel", "parallel", "arbitrary"),
            vmem_limit_bytes=int(vmem_limit),
        ),
        cost_estimate=pl.CostEstimate(
            flops=2 * M * N * Kp,
            transcendentals=0,
            bytes_accessed=(M * Kp + N * Kp + M * N + N) * elem,
        ),
    )(x_in, w_in, b2)
    return out.astype(out_dtype)


# ----------------------------------------------------------------------------
# Demo / self-check
# ----------------------------------------------------------------------------
if __name__ == "__main__":
    # Shapes consistent with the module: x (2, 4, 16, 16) -> input_size = 1024
    batch, C, H, W = 2, 4, 16, 16
    input_size = C * H * W
    num_classes = 10

    key = jax.random.PRNGKey(0)
    kx, kw, kb = jax.random.split(key, 3)

    x = jax.random.normal(kx, (batch, C, H, W), dtype=jnp.float32)
    # PyTorch-like uniform(-1/sqrt(fan_in), 1/sqrt(fan_in)) init
    bound = 1.0 / (input_size ** 0.5)
    weight = jax.random.uniform(kw, (num_classes, input_size), jnp.float32, -bound, bound)
    bias = jax.random.uniform(kb, (num_classes,), jnp.float32, -bound, bound)

    y = jax.jit(linear_net_forward)(x, weight, bias)
    jax.block_until_ready(y)

    # Reference check in plain JAX
    y_ref = x.reshape(batch, -1) @ weight.T + bias
    assert y.shape == (batch, num_classes)
    assert jnp.allclose(y, y_ref, atol=1e-4, rtol=1e-4)

    print("KERNEL_OK")
</pallas_src>

<mosaic_0001>
module attributes {stable_mosaic.version = 11 : i64} {
  func.func @_linear_single_block_kernel(%arg0: memref<2x1024xf32, #tpu.memory_space<vmem>>, %arg1: memref<10x1024xf32, #tpu.memory_space<vmem>>, %arg2: memref<1x10xf32, #tpu.memory_space<vmem>>, %arg3: memref<2x10xf32, #tpu.memory_space<vmem>>) attributes {dimension_semantics = [], scalar_prefetch = 0 : i64, scratch_operands = 0 : i64, tpu.core_type = #tpu.core_type<tc>} {
    %c0 = arith.constant 0 : index
    %c0_0 = arith.constant 0 : index
    %0 = vector.load %arg0[%c0, %c0_0] : memref<2x1024xf32, #tpu.memory_space<vmem>>, vector<2x1024xf32>
    %c0_1 = arith.constant 0 : index
    %c0_2 = arith.constant 0 : index
    %1 = vector.load %arg1[%c0_1, %c0_2] : memref<10x1024xf32, #tpu.memory_space<vmem>>, vector<10x1024xf32>
    %cst = arith.constant dense<0.000000e+00> : vector<2x10xf32>
    %2 = tpu.matmul %0, %1, %cst {dimension_numbers = #tpu.dot_dimension_numbers<[1], [1], [0], [0], [0, 0, 1, 0], [], []>} : vector<2x1024xf32>, vector<10x1024xf32>, vector<2x10xf32> -> vector<2x10xf32>
    %c0_3 = arith.constant 0 : index
    %c0_4 = arith.constant 0 : index
    %3 = vector.load %arg2[%c0_3, %c0_4] : memref<1x10xf32, #tpu.memory_space<vmem>>, vector<1x10xf32>
    %4 = vector.broadcast %3 : vector<1x10xf32> to vector<2x10xf32>
    %5 = arith.addf %2, %4 : vector<2x10xf32>
    %c0_5 = arith.constant 0 : index
    %c0_6 = arith.constant 0 : index
    %6 = vector.load %arg3[%c0_5, %c0_6] : memref<2x10xf32, #tpu.memory_space<vmem>>, vector<2x10xf32>
    tpu.vector_store %arg3[%c0_5, %c0_6], %5 {strides = array<i32>} : memref<2x10xf32, #tpu.memory_space<vmem>>, vector<2x10xf32>,
    return
  }
}

</mosaic_0001>

<llo_original>
// kernel: linear_net_forward.1
$region0: #{linear_net_forward.1}
  #allocation0 [shape = 'u32[]', space=smem, size = 0x4, offset = 0x4, fixed_abs, tag = 'smem constant byte address 0x4 - core index']
  #allocation1 [shape = 'u32[144,128]{1,0:T(1,128)}', space=vmem, size = 0x12000, scoped, tag = 'internal scratch']
  %s0 = inlined_call_operand.vmem [shape: f32[2,1024], index: 0, kind: input, shape index: {}]
  %s1 = inlined_call_operand.vmem [shape: f32[10,1024], index: 1, kind: input, shape index: {}]
  %s2 = inlined_call_operand.vmem [shape: f32[1,10], index: 2, kind: input, shape index: {}]
  %s3 = inlined_call_operand.hbm [shape: f32[2,10], index: 3, kind: output, shape index: {}]
  %s4 = sld [smem:[#allocation0]]
  $region22: #{linear_net_forward.1} parent=0
    _
  %s6 = ssub.s32 1, %s4
  %s7 = scalar_select 0, %s6, %s4
  $region1: #{linear_net_forward.1} parent=0
    #allocation2 [shape = 'u8[1024]{0}', space=vmem, size = 0x400, scoped, tag = 'output window, operand 0, single buffered']
    #allocation3 [shape = 's32[1]{0}', space=sflag, size = 0x4, scoped, tag = 'scoped memory for linear_net_forward.1']
    %8 = vsyncpa [#allocation3], 0
    // Predicated region
    $region2: #{linear_net_forward.1} parent=1 // pred_check
      _
    $region3: #{linear_net_forward.1} parent=1 // pred_check_branch
      %10 = sbr.rel (0) target = $region5
    $region4: #{linear_net_forward.1} parent=1 // pred_region
      _
    $region5: #{linear_net_forward.1} parent=1 // pred_fallthru
      _
    // Predicated region
    $region6: #{linear_net_forward.1} parent=1 // pred_check
      _
    $region7: #{linear_net_forward.1} parent=1 // pred_check_branch
      %12 = sbr.rel (0) target = $region9
    $region8: #{linear_net_forward.1} parent=1 // pred_region
      _
    $region9: #{linear_net_forward.1} parent=1 // pred_fallthru
      _
    // Predicated region
    $region10: #{linear_net_forward.1} parent=1 // pred_check
      _
    $region11: #{linear_net_forward.1} parent=1 // pred_check_branch
      %14 = sbr.rel (0) target = $region13
    $region12: #{linear_net_forward.1} parent=1 // pred_region
      _
    $region13: #{linear_net_forward.1} parent=1 // pred_fallthru
      _
    %v15 = vld [vmem:[%s0] sm:$0xff]
    %v16 = vld [vmem:[%s0 + $0x8] sm:$0xff]
    %v17 = vld [vmem:[%s1] sm:$0xff]
    %v18 = vld [vmem:[%s1 + $0x8] sm:$0xff]
    %v19 = vld [vmem:[%s1 + $0x10] sm:$0xff]
    %v20 = vld [vmem:[%s1 + $0x18] sm:$0xff]
    %v21 = vld [vmem:[%s1 + $0x20] sm:$0xff]
    %v22 = vld [vmem:[%s1 + $0x28] sm:$0xff]
    %v23 = vld [vmem:[%s1 + $0x30] sm:$0xff]
    %v24 = vld [vmem:[%s1 + $0x38] sm:$0xff]
    %v25 = vld [vmem:[%s1 + $0x40] sm:$0x3]
    %v26 = vld [vmem:[%s1 + $0x48] sm:$0x3]
    %v27 = vld [vmem:[%s1 + $0x50] sm:$0x3]
    %v28 = vld [vmem:[%s1 + $0x58] sm:$0x3]
    %v29 = vld [vmem:[%s1 + $0x60] sm:$0x3]
    %v30 = vld [vmem:[%s1 + $0x68] sm:$0x3]
    %v31 = vld [vmem:[%s1 + $0x70] sm:$0x3]
    %v32 = vld [vmem:[%s1 + $0x78] sm:$0x3]
    %v33 = vld [vmem:[%s2] sm:$0x1]
    %v35 = vlaneseq
    %v36 = vshrl.u32 %v35, 7
    %v37 = vsub.s32 0, %v36
    %v38 = vrot.slane %v33, %v37
    %v42 = vcombine.high %v15, %v15
    %v44 = vunpack.c.l.s4 1983009808
    %v45 = vunpack.c.0.s8 %v44
    %v46 = vlaneseq
    %v47 = vshrl.u32 %v46, 7
    %v48 = vsub.s32 %v45, %v47
    %v49 = vrot.slane %v15, %v48
    %v51 = vunpack.c.l.s4 1983009808
    %v52 = vunpack.c.0.s8 %v51
    %v53 = vlaneseq
    %v54 = vshrl.u32 %v53, 7
    %v55 = vsub.s32 %v52, %v54
    %v56 = vrot.slane %v42, %v55
    %v57 = vcombine.high %v49, %v49
    %v58 = vcombine.high %v56, %v56
    %v59 = vcombine.high %v16, %v16
    %v61 = vunpack.c.l.s4 1983009808
    %v62 = vunpack.c.0.s8 %v61
    %v63 = vlaneseq
    %v64 = vshrl.u32 %v63, 7
    %v65 = vsub.s32 %v62, %v64
    %v66 = vrot.slane %v16, %v65
    %v68 = vunpack.c.l.s4 1983009808
    %v69 = vunpack.c.0.s8 %v68
    %v70 = vlaneseq
    %v71 = vshrl.u32 %v70, 7
    %v72 = vsub.s32 %v69, %v71
    %v73 = vrot.slane %v59, %v72
    %v74 = vcombine.high %v66, %v66
    %v75 = vcombine.high %v73, %v73
    %84 = vmatprep.subr.mxu0 %v18
    %85 = vmatpush1.xpose.msra.mxu0 %v17
    %86 = vmatprep.subr.mxu0 %v26
    %87 = vmatpush1.xpose.msra.mxu0 %v25
    %88 = vmatprep.subr.mxu0 0.0
    %89 = vmatpush1.xpose.msra.mxu0 0.0
    %90 = vmatprep.subr.mxu0 0.0
    %91 = vmatpush1.xpose.msra.mxu0 0.0
    %92 = vmatprep.subr.mxu0 0.0
    %93 = vmatpush1.xpose.msra.mxu0 0.0
    %94 = vmatprep.subr.mxu0 0.0
    %95 = vmatpush1.xpose.msra.mxu0 0.0
    %96 = vmatprep.subr.mxu0 0.0
    %97 = vmatpush1.xpose.msra.mxu0 0.0
    %98 = vmatprep.subr.mxu0 0.0
    %99 = vmatpush1.xpose.msra.mxu0 0.0
    %100 = vmatprep.subr.mxu0 0.0
    %101 = vmatpush1.xpose.msra.mxu0 0.0
    %102 = vmatprep.subr.mxu0 0.0
    %103 = vmatpush1.xpose.msra.mxu0 0.0
    %104 = vmatprep.subr.mxu0 0.0
    %105 = vmatpush1.xpose.msra.mxu0 0.0
    %106 = vmatprep.subr.mxu0 0.0
    %107 = vmatpush1.xpose.msra.mxu0 0.0
    %108 = vmatprep.subr.mxu0 0.0
    %109 = vmatpush1.xpose.msra.mxu0 0.0
    %110 = vmatprep.subr.mxu0 0.0
    %111 = vmatpush1.xpose.msra.mxu0 0.0
    %112 = vmatprep.subr.mxu0 0.0
    %113 = vmatpush1.xpose.msra.mxu0 0.0
    %114 = vmatprep.subr.mxu0 0.0
    %115 = vmatpush1.xpose.msra.mxu0 0.0
    %116 = vmatprep.subr.mxu0 0.0
    %117 = vmatpush1.xpose.msra.mxu0 0.0
    %118 = vmatprep.subr.mxu0 0.0
    %119 = vmatpush1.xpose.msra.mxu0 0.0
    %120 = vmatprep.subr.mxu0 0.0
    %121 = vmatpush1.xpose.msra.mxu0 0.0
    %122 = vmatprep.subr.mxu0 0.0
    %123 = vmatpush1.xpose.msra.mxu0 0.0
    %124 = vmatprep.subr.mxu0 0.0
    %125 = vmatpush1.xpose.msra.mxu0 0.0
    %126 = vmatprep.subr.mxu0 0.0
    %127 = vmatpush1.xpose.msra.mxu0 0.0
    %128 = vmatprep.subr.mxu0 0.0
    %129 = vmatpush1.xpose.msra.mxu0 0.0
    %130 = vmatprep.subr.mxu0 0.0
    %131 = vmatpush1.xpose.msra.mxu0 0.0
    %132 = vmatprep.subr.mxu0 0.0
    %133 = vmatpush1.xpose.msra.mxu0 0.0
    %134 = vmatprep.subr.mxu0 0.0
    %135 = vmatpush1.xpose.msra.mxu0 0.0
    %136 = vmatprep.subr.mxu0 0.0
    %137 = vmatpush1.xpose.msra.mxu0 0.0
    %138 = vmatprep.subr.mxu0 0.0
    %139 = vmatpush1.xpose.msra.mxu0 0.0
    %140 = vmatprep.subr.mxu0 0.0
    %141 = vmatpush1.xpose.msra.mxu0 0.0
    %142 = vmatprep.subr.mxu0 0.0
    %143 = vmatpush1.xpose.msra.mxu0 0.0
    %144 = vmatprep.subr.mxu0 0.0
    %145 = vmatpush1.xpose.msra.mxu0 0.0
    %146 = vmatprep.subr.mxu0 0.0
    %147 = vmatpush1.xpose.msra.mxu0 0.0
    %148 = vmatprep.mubr.f32.mxu0 %v57
    %149 = vmatmul.mubr.f32.gmra.mrb[0].mxu0 %v49
    %v150 = vpop.f32.mrb[0].mxu0
    %v151 = vadd.f32 %v38, %v150
    %v152 = vpop.f32.mrb[0].mxu0
    %153 = vdwg.mxu0
    %154 = vmatprep.subr.mxu0 %v20
    %155 = vmatpush1.xpose.msra.mxu0 %v19
    %156 = vmatprep.subr.mxu0 %v28
    %157 = vmatpush1.xpose.msra.mxu0 %v27
    %158 = vmatprep.subr.mxu0 0.0
    %159 = vmatpush1.xpose.msra.mxu0 0.0
    %160 = vmatprep.subr.mxu0 0.0
    %161 = vmatpush1.xpose.msra.mxu0 0.0
    %162 = vmatprep.subr.mxu0 0.0
    %163 = vmatpush1.xpose.msra.mxu0 0.0
    %164 = vmatprep.subr.mxu0 0.0
    %165 = vmatpush1.xpose.msra.mxu0 0.0
    %166 = vmatprep.subr.mxu0 0.0
    %167 = vmatpush1.xpose.msra.mxu0 0.0
    %168 = vmatprep.subr.mxu0 0.0
    %169 = vmatpush1.xpose.msra.mxu0 0.0
    %170 = vmatprep.subr.mxu0 0.0
    %171 = vmatpush1.xpose.msra.mxu0 0.0
    %172 = vmatprep.subr.mxu0 0.0
    %173 = vmatpush1.xpose.msra.mxu0 0.0
    %174 = vmatprep.subr.mxu0 0.0
    %175 = vmatpush1.xpose.msra.mxu0 0.0
    %176 = vmatprep.subr.mxu0 0.0
    %177 = vmatpush1.xpose.msra.mxu0 0.0
    %178 = vmatprep.subr.mxu0 0.0
    %179 = vmatpush1.xpose.msra.mxu0 0.0
    %180 = vmatprep.subr.mxu0 0.0
    %181 = vmatpush1.xpose.msra.mxu0 0.0
    %182 = vmatprep.subr.mxu0 0.0
    %183 = vmatpush1.xpose.msra.mxu0 0.0
    %184 = vmatprep.subr.mxu0 0.0
    %185 = vmatpush1.xpose.msra.mxu0 0.0
    %186 = vmatprep.subr.mxu0 0.0
    %187 = vmatpush1.xpose.msra.mxu0 0.0
    %188 = vmatprep.subr.mxu0 0.0
    %189 = vmatpush1.xpose.msra.mxu0 0.0
    %190 = vmatprep.subr.mxu0 0.0
    %191 = vmatpush1.xpose.msra.mxu0 0.0
    %192 = vmatprep.subr.mxu0 0.0
    %193 = vmatpush1.xpose.msra.mxu0 0.0
    %194 = vmatprep.subr.mxu0 0.0
    %195 = vmatpush1.xpose.msra.mxu0 0.0
    %196 = vmatprep.subr.mxu0 0.0
    %197 = vmatpush1.xpose.msra.mxu0 0.0
    %198 = vmatprep.subr.mxu0 0.0
    %199 = vmatpush1.xpose.msra.mxu0 0.0
    %200 = vmatprep.subr.mxu0 0.0
    %201 = vmatpush1.xpose.msra.mxu0 0.0
    %202 = vmatprep.subr.mxu0 0.0
    %203 = vmatpush1.xpose.msra.mxu0 0.0
    %204 = vmatprep.subr.mxu0 0.0
    %205 = vmatpush1.xpose.msra.mxu0 0.0
    %206 = vmatprep.subr.mxu0 0.0
    %207 = vmatpush1.xpose.msra.mxu0 0.0
    %208 = vmatprep.subr.mxu0 0.0
    %209 = vmatpush1.xpose.msra.mxu0 0.0
    %210 = vmatprep.subr.mxu0 0.0
    %211 = vmatpush1.xpose.msra.mxu0 0.0
    %212 = vmatprep.subr.mxu0 0.0
    %213 = vmatpush1.xpose.msra.mxu0 0.0
    %214 = vmatprep.subr.mxu0 0.0
    %215 = vmatpush1.xpose.msra.mxu0 0.0
    %216 = vmatprep.subr.mxu0 0.0
    %217 = vmatpush1.xpose.msra.mxu0 0.0
    %218 = vmatprep.mubr.f32.mxu0 %v58
    %219 = vmatmul.mubr.f32.gmra.mrb[0].mxu0 %v56
    %v220 = vpop.f32.mrb[0].mxu0
    %v221 = vadd.f32 %v151, %v220
    %v222 = vpop.f32.mrb[0].mxu0
    %223 = vdwg.mxu0
    %224 = vmatprep.subr.mxu0 %v22
    %225 = vmatpush1.xpose.msra.mxu0 %v21
    %226 = vmatprep.subr.mxu0 %v30
    %227 = vmatpush1.xpose.msra.mxu0 %v29
    %228 = vmatprep.subr.mxu0 0.0
    %229 = vmatpush1.xpose.msra.mxu0 0.0
    %230 = vmatprep.subr.mxu0 0.0
    %231 = vmatpush1.xpose.msra.mxu0 0.0
    %232 = vmatprep.subr.mxu0 0.0
    %233 = vmatpush1.xpose.msra.mxu0 0.0
    %234 = vmatprep.subr.mxu0 0.0
    %235 = vmatpush1.xpose.msra.mxu0 0.0
    %236 = vmatprep.subr.mxu0 0.0
    %237 = vmatpush1.xpose.msra.mxu0 0.0
    %238 = vmatprep.subr.mxu0 0.0
    %239 = vmatpush1.xpose.msra.mxu0 0.0
    %240 = vmatprep.subr.mxu0 0.0
    %241 = vmatpush1.xpose.msra.mxu0 0.0
    %242 = vmatprep.subr.mxu0 0.0
    %243 = vmatpush1.xpose.msra.mxu0 0.0
    %244 = vmatprep.subr.mxu0 0.0
    %245 = vmatpush1.xpose.msra.mxu0 0.0
    %246 = vmatprep.subr.mxu0 0.0
    %247 = vmatpush1.xpose.msra.mxu0 0.0
    %248 = vmatprep.subr.mxu0 0.0
    %249 = vmatpush1.xpose.msra.mxu0 0.0
    %250 = vmatprep.subr.mxu0 0.0
    %251 = vmatpush1.xpose.msra.mxu0 0.0
    %252 = vmatprep.subr.mxu0 0.0
    %253 = vmatpush1.xpose.msra.mxu0 0.0
    %254 = vmatprep.subr.mxu0 0.0
    %255 = vmatpush1.xpose.msra.mxu0 0.0
    %256 = vmatprep.subr.mxu0 0.0
    %257 = vmatpush1.xpose.msra.mxu0 0.0
    %258 = vmatprep.subr.mxu0 0.0
    %259 = vmatpush1.xpose.msra.mxu0 0.0
    %260 = vmatprep.subr.mxu0 0.0
    %261 = vmatpush1.xpose.msra.mxu0 0.0
    %262 = vmatprep.subr.mxu0 0.0
    %263 = vmatpush1.xpose.msra.mxu0 0.0
    %264 = vmatprep.subr.mxu0 0.0
    %265 = vmatpush1.xpose.msra.mxu0 0.0
    %266 = vmatprep.subr.mxu0 0.0
    %267 = vmatpush1.xpose.msra.mxu0 0.0
    %268 = vmatprep.subr.mxu0 0.0
    %269 = vmatpush1.xpose.msra.mxu0 0.0
    %270 = vmatprep.subr.mxu0 0.0
    %271 = vmatpush1.xpose.msra.mxu0 0.0
    %272 = vmatprep.subr.mxu0 0.0
    %273 = vmatpush1.xpose.msra.mxu0 0.0
    %274 = vmatprep.subr.mxu0 0.0
    %275 = vmatpush1.xpose.msra.mxu0 0.0
    %276 = vmatprep.subr.mxu0 0.0
    %277 = vmatpush1.xpose.msra.mxu0 0.0
    %278 = vmatprep.subr.mxu0 0.0
    %279 = vmatpush1.xpose.msra.mxu0 0.0
    %280 = vmatprep.subr.mxu0 0.0
    %281 = vmatpush1.xpose.msra.mxu0 0.0
    %282 = vmatprep.subr.mxu0 0.0
    %283 = vmatpush1.xpose.msra.mxu0 0.0
    %284 = vmatprep.subr.mxu0 0.0
    %285 = vmatpush1.xpose.msra.mxu0 0.0
    %286 = vmatprep.subr.mxu0 0.0
    %287 = vmatpush1.xpose.msra.mxu0 0.0
    %288 = vmatprep.mubr.f32.mxu0 %v74
    %289 = vmatmul.mubr.f32.gmra.mrb[0].mxu0 %v66
    %v290 = vpop.f32.mrb[0].mxu0
    %v291 = vadd.f32 %v221, %v290
    %v292 = vpop.f32.mrb[0].mxu0
    %293 = vdwg.mxu0
    %294 = vmatprep.subr.mxu0 %v24
    %295 = vmatpush1.xpose.msra.mxu0 %v23
    %296 = vmatprep.subr.mxu0 %v32
    %297 = vmatpush1.xpose.msra.mxu0 %v31
    %298 = vmatprep.subr.mxu0 0.0
    %299 = vmatpush1.xpose.msra.mxu0 0.0
    %300 = vmatprep.subr.mxu0 0.0
    %301 = vmatpush1.xpose.msra.mxu0 0.0
    %302 = vmatprep.subr.mxu0 0.0
    %303 = vmatpush1.xpose.msra.mxu0 0.0
    %304 = vmatprep.subr.mxu0 0.0
    %305 = vmatpush1.xpose.msra.mxu0 0.0
    %306 = vmatprep.subr.mxu0 0.0
    %307 = vmatpush1.xpose.msra.mxu0 0.0
    %308 = vmatprep.subr.mxu0 0.0
    %309 = vmatpush1.xpose.msra.mxu0 0.0
    %310 = vmatprep.subr.mxu0 0.0
    %311 = vmatpush1.xpose.msra.mxu0 0.0
    %312 = vmatprep.subr.mxu0 0.0
    %313 = vmatpush1.xpose.msra.mxu0 0.0
    %314 = vmatprep.subr.mxu0 0.0
    %315 = vmatpush1.xpose.msra.mxu0 0.0
    %316 = vmatprep.subr.mxu0 0.0
    %317 = vmatpush1.xpose.msra.mxu0 0.0
    %318 = vmatprep.subr.mxu0 0.0
    %319 = vmatpush1.xpose.msra.mxu0 0.0
    %320 = vmatprep.subr.mxu0 0.0
    %321 = vmatpush1.xpose.msra.mxu0 0.0
    %322 = vmatprep.subr.mxu0 0.0
    %323 = vmatpush1.xpose.msra.mxu0 0.0
    %324 = vmatprep.subr.mxu0 0.0
    %325 = vmatpush1.xpose.msra.mxu0 0.0
    %326 = vmatprep.subr.mxu0 0.0
    %327 = vmatpush1.xpose.msra.mxu0 0.0
    %328 = vmatprep.subr.mxu0 0.0
    %329 = vmatpush1.xpose.msra.mxu0 0.0
    %330 = vmatprep.subr.mxu0 0.0
    %331 = vmatpush1.xpose.msra.mxu0 0.0
    %332 = vmatprep.subr.mxu0 0.0
    %333 = vmatpush1.xpose.msra.mxu0 0.0
    %334 = vmatprep.subr.mxu0 0.0
    %335 = vmatpush1.xpose.msra.mxu0 0.0
    %336 = vmatprep.subr.mxu0 0.0
    %337 = vmatpush1.xpose.msra.mxu0 0.0
    %338 = vmatprep.subr.mxu0 0.0
    %339 = vmatpush1.xpose.msra.mxu0 0.0
    %340 = vmatprep.subr.mxu0 0.0
    %341 = vmatpush1.xpose.msra.mxu0 0.0
    %342 = vmatprep.subr.mxu0 0.0
    %343 = vmatpush1.xpose.msra.mxu0 0.0
    %344 = vmatprep.subr.mxu0 0.0
    %345 = vmatpush1.xpose.msra.mxu0 0.0
    %346 = vmatprep.subr.mxu0 0.0
    %347 = vmatpush1.xpose.msra.mxu0 0.0
    %348 = vmatprep.subr.mxu0 0.0
    %349 = vmatpush1.xpose.msra.mxu0 0.0
    %350 = vmatprep.subr.mxu0 0.0
    %351 = vmatpush1.xpose.msra.mxu0 0.0
    %352 = vmatprep.subr.mxu0 0.0
    %353 = vmatpush1.xpose.msra.mxu0 0.0
    %354 = vmatprep.subr.mxu0 0.0
    %355 = vmatpush1.xpose.msra.mxu0 0.0
    %356 = vmatprep.subr.mxu0 0.0
    %357 = vmatpush1.xpose.msra.mxu0 0.0
    %358 = vmatprep.mubr.f32.mxu0 %v75
    %359 = vmatmul.mubr.f32.gmra.mrb[0].mxu0 %v73
    %v360 = vpop.f32.mrb[0].mxu0
    %v361 = vadd.f32 %v291, %v360
    %v362 = vpop.f32.mrb[0].mxu0
    %363 = vdwg.mxu0
    %vm364 = vcmask 74752
    %365 = vst.msk [vmem:[#allocation2] sm:$0x3] %vm364, %v361
    // Predicated region
    $region14: #{linear_net_forward.1} parent=1 // pred_check
      _
    $region15: #{linear_net_forward.1} parent=1 // pred_check_branch
      %367 = sbr.rel (0) target = $region17
    $region16: #{linear_net_forward.1} parent=1 // pred_region
      %s369 = ssub.s32 32, 32
      %370 = vsyncadd [#allocation3], %s369
      %s372 = sshll.u32 [#allocation2], 4
      %s373 = int_to_ptr.vmem [resolvable:$true] %s372
      %375 = dma.vmem_to_hbm [thread:$0]  %s373, 32, %s3, [#allocation3]
    $region17: #{linear_net_forward.1} parent=1 // pred_fallthru
      _
    // Predicated region
    $region18: #{linear_net_forward.1} parent=1 // pred_check
      _
    $region19: #{linear_net_forward.1} parent=1 // pred_check_branch
      %377 = sbr.rel (0) target = $region21
    $region20: #{linear_net_forward.1} parent=1 // pred_region
      %378 = dma.done [#allocation3], 32
    $region21: #{linear_net_forward.1} parent=1 // pred_fallthru
      _
    %379 = vsyncpa [#allocation3], 1

</llo_original>
